<compile_context>
chip_gen: v7x
topology: tpu7x:2x2x1
jax: 0.10.0
libtpu: 0.0.40
codegen_flags: <defaults>
</compile_context>

<pallas_src>
import jax
import jax.numpy as jnp
import numpy as np
from jax.experimental import pallas as pl
from jax.experimental.pallas import tpu as pltpu

_LANES = 128
_ELEMS = 16  # flattened row-major 4x4


def _pjoint_kernel(axis_ref, q_ref, out_ref):
    # axis_ref: (3,)      f32  SMEM  -- joint axis components
    # q_ref:    (R, 128)  f32  VMEM  -- q replicated 16x per batch element
    # out_ref:  (R, 128)  f32  VMEM  -- 8 flattened 4x4 T_joint matrices / row
    lane = jax.lax.broadcasted_iota(jnp.int32, out_ref.shape, 1)
    e = lane & (_ELEMS - 1)          # position inside the flattened 4x4
    r = e >> 2                       # matrix row
    c = e & 3                        # matrix col

    # identity pattern (diagonal of the 4x4)
    eye_pat = jnp.where(r == c, 1.0, 0.0).astype(jnp.float32)

    # axis scatter pattern: col 3, rows 0..2 get axis[0..2]
    ax0 = axis_ref[0]
    ax1 = axis_ref[1]
    ax2 = axis_ref[2]
    is_p = c == 3
    axis_pat = jnp.where(is_p & (r == 0), ax0,
               jnp.where(is_p & (r == 1), ax1,
               jnp.where(is_p & (r == 2), ax2, 0.0))).astype(jnp.float32)

    # single per-lane VPU FMA
    out_ref[...] = eye_pat + q_ref[...] * axis_pat


def _rpy2r(rpy):
    r, p, y = rpy[0], rpy[1], rpy[2]
    cphi, sphi = jnp.cos(r), jnp.sin(r)
    cthe, sthe = jnp.cos(p), jnp.sin(p)
    cpsi, spsi = jnp.cos(y), jnp.sin(y)
    row0 = jnp.stack([cpsi * cthe, -spsi * cphi + cpsi * sthe * sphi,
                      spsi * sphi + cpsi * sthe * cphi])
    row1 = jnp.stack([spsi * cthe, cpsi * cphi + spsi * sthe * sphi,
                      -cpsi * sphi + spsi * sthe * cphi])
    row2 = jnp.stack([-sthe, cthe * sphi, cthe * cphi])
    return jnp.stack([row0, row1, row2]).astype(jnp.float32)


@jax.jit
def pjoint_forward(q_value, p_offset, rpy_offset, axis):
    """q_value: (B,); p_offset: (3,1); rpy_offset: (3,); axis: (3,1)."""
    q_value = q_value.astype(jnp.float32)
    B = q_value.shape[0]

    # ---- T_offset: batch-independent, computed in plain XLA (hoisted). ----
    R3 = _rpy2r(rpy_offset.astype(jnp.float32))
    T_offset = (jnp.eye(4, dtype=jnp.float32)
                .at[:3, :3].set(R3)
                .at[:3, 3].set(p_offset.reshape(3).astype(jnp.float32)))

    # ---- lane-dense packing: 8 flattened 4x4 matrices per 128-lane row ----
    B_pad = ((B + 7) // 8) * 8
    n_rows = (B_pad * _ELEMS) // _LANES
    q_pad = jnp.zeros((B_pad,), jnp.float32).at[:B].set(q_value)
    q_tiled = jnp.repeat(q_pad, _ELEMS).reshape(n_rows, _LANES)

    axis_flat = axis.reshape(3).astype(jnp.float32)

    tj_flat = pl.pallas_call(
        _pjoint_kernel,
        out_shape=jax.ShapeDtypeStruct((n_rows, _LANES), jnp.float32),
        in_specs=[
            pl.BlockSpec(memory_space=pltpu.MemorySpace.SMEM),   # axis (3,)
            pl.BlockSpec(memory_space=pltpu.MemorySpace.VMEM),   # q_tiled
        ],
        out_specs=pl.BlockSpec(memory_space=pltpu.MemorySpace.VMEM),
        cost_estimate=pl.CostEstimate(
            flops=2 * B_pad * _ELEMS,
            bytes_accessed=2 * B_pad * _ELEMS * 4 + 3 * 4,
            transcendentals=0),
    )(axis_flat, q_tiled)

    T_joint = tj_flat.reshape(B_pad, 4, 4)[:B]
    return T_offset, T_joint


def _reference(q_value, p_offset, rpy_offset, axis):
    # pure-JAX re-implementation of the PyTorch forward (rpy2r / pr2t / bmul_1d)
    r, p, y = rpy_offset[0], rpy_offset[1], rpy_offset[2]
    cphi, sphi = jnp.cos(r), jnp.sin(r)
    cthe, sthe = jnp.cos(p), jnp.sin(p)
    cpsi, spsi = jnp.cos(y), jnp.sin(y)
    R = jnp.array([
        [cpsi * cthe, -spsi * cphi + cpsi * sthe * sphi,  spsi * sphi + cpsi * sthe * cphi],
        [spsi * cthe,  cpsi * cphi + spsi * sthe * sphi, -cpsi * sphi + spsi * sthe * cphi],
        [-sthe,        cthe * sphi,                       cthe * cphi],
    ], dtype=jnp.float32)
    T_off = jnp.eye(4, dtype=jnp.float32).at[:3, :3].set(R).at[:3, 3].set(p_offset[:, 0])
    B = q_value.shape[0]
    p_b = q_value[:, None, None] * jnp.tile(axis, (B, 1, 1))        # bmul_1d -> (B,3,1)
    T_j = jnp.tile(jnp.eye(4, dtype=jnp.float32), (B, 1, 1)).at[:, :3, 3].set(p_b[:, :, 0])
    return T_off, T_j


if __name__ == "__main__":
    key = jax.random.PRNGKey(0)
    k1, k2, k3, k4 = jax.random.split(key, 4)

    # deterministic "parameter init" (init.normal_ with the PRIMNET stds)
    p_offset_std = 0.1
    rpy_offset_std = 0.1
    B = 8
    p_offset = jax.random.normal(k1, (3, 1), jnp.float32) * p_offset_std
    rpy_offset = jax.random.normal(k2, (3,), jnp.float32) * rpy_offset_std
    axis = jax.random.normal(k3, (3, 1), jnp.float32) * p_offset_std
    q_value = jax.random.normal(k4, (B,), jnp.float32)

    T_offset, T_joint = pjoint_forward(q_value, p_offset, rpy_offset, axis)
    jax.block_until_ready((T_offset, T_joint))

    T_off_ref, T_j_ref = _reference(q_value, p_offset, rpy_offset, axis)
    np.testing.assert_allclose(np.asarray(T_offset), np.asarray(T_off_ref),
                               rtol=1e-5, atol=1e-5)
    np.testing.assert_allclose(np.asarray(T_joint), np.asarray(T_j_ref),
                               rtol=1e-5, atol=1e-5)
    print("KERNEL_OK")
</pallas_src>

<mosaic_0001>
module attributes {stable_mosaic.version = 11 : i64} {
  func.func @_pjoint_kernel(%arg0: memref<3xf32, #tpu.memory_space<smem>>, %arg1: memref<1x128xf32, #tpu.memory_space<vmem>>, %arg2: memref<1x128xf32, #tpu.memory_space<vmem>>) attributes {dimension_semantics = [], scalar_prefetch = 0 : i64, scratch_operands = 0 : i64, tpu.core_type = #tpu.core_type<tc>} {
    %0 = tpu.iota {dimensions = array<i32: 1>} : vector<1x128xi32>
    %c15_i32 = arith.constant 15 : i32
    %1 = vector.broadcast %c15_i32 : i32 to vector<1x128xi32>
    %2 = arith.andi %0, %1 : vector<1x128xi32>
    %c2_i32 = arith.constant 2 : i32
    %3 = vector.broadcast %c2_i32 : i32 to vector<1x128xi32>
    %4 = arith.shrsi %2, %3 : vector<1x128xi32>
    %c3_i32 = arith.constant 3 : i32
    %5 = vector.broadcast %c3_i32 : i32 to vector<1x128xi32>
    %6 = arith.andi %2, %5 : vector<1x128xi32>
    %7 = arith.cmpi eq, %4, %6 : vector<1x128xi32>
    %cst = arith.constant 1.000000e+00 : f32
    %cst_0 = arith.constant 0.000000e+00 : f32
    %8 = vector.broadcast %cst : f32 to vector<1x128xf32>
    %9 = vector.broadcast %cst_0 : f32 to vector<1x128xf32>
    %10 = arith.select %7, %8, %9 : vector<1x128xi1>, vector<1x128xf32>
    %c0 = arith.constant 0 : index
    %11 = memref.load %arg0[%c0] : memref<3xf32, #tpu.memory_space<smem>>
    %c1 = arith.constant 1 : index
    %12 = memref.load %arg0[%c1] : memref<3xf32, #tpu.memory_space<smem>>
    %c2 = arith.constant 2 : index
    %13 = memref.load %arg0[%c2] : memref<3xf32, #tpu.memory_space<smem>>
    %c3_i32_1 = arith.constant 3 : i32
    %14 = vector.broadcast %c3_i32_1 : i32 to vector<1x128xi32>
    %15 = arith.cmpi eq, %6, %14 : vector<1x128xi32>
    %c0_i32 = arith.constant 0 : i32
    %16 = vector.broadcast %c0_i32 : i32 to vector<1x128xi32>
    %17 = arith.cmpi eq, %4, %16 : vector<1x128xi32>
    %18 = arith.andi %15, %17 : vector<1x128xi1>
    %c1_i32 = arith.constant 1 : i32
    %19 = vector.broadcast %c1_i32 : i32 to vector<1x128xi32>
    %20 = arith.cmpi eq, %4, %19 : vector<1x128xi32>
    %21 = arith.andi %15, %20 : vector<1x128xi1>
    %c2_i32_2 = arith.constant 2 : i32
    %22 = vector.broadcast %c2_i32_2 : i32 to vector<1x128xi32>
    %23 = arith.cmpi eq, %4, %22 : vector<1x128xi32>
    %24 = arith.andi %15, %23 : vector<1x128xi1>
    %cst_3 = arith.constant 0.000000e+00 : f32
    %25 = vector.broadcast %13 : f32 to vector<1x128xf32>
    %26 = vector.broadcast %cst_3 : f32 to vector<1x128xf32>
    %27 = arith.select %24, %25, %26 : vector<1x128xi1>, vector<1x128xf32>
    %28 = vector.broadcast %12 : f32 to vector<1x128xf32>
    %29 = arith.select %21, %28, %27 : vector<1x128xi1>, vector<1x128xf32>
    %30 = vector.broadcast %11 : f32 to vector<1x128xf32>
    %31 = arith.select %18, %30, %29 : vector<1x128xi1>, vector<1x128xf32>
    %c0_4 = arith.constant 0 : index
    %c0_5 = arith.constant 0 : index
    %32 = vector.load %arg1[%c0_4, %c0_5] : memref<1x128xf32, #tpu.memory_space<vmem>>, vector<1x128xf32>
    %33 = arith.mulf %32, %31 : vector<1x128xf32>
    %34 = arith.addf %10, %33 : vector<1x128xf32>
    %c0_6 = arith.constant 0 : index
    %c0_7 = arith.constant 0 : index
    %35 = vector.load %arg2[%c0_6, %c0_7] : memref<1x128xf32, #tpu.memory_space<vmem>>, vector<1x128xf32>
    tpu.vector_store %arg2[%c0_6, %c0_7], %34 {strides = array<i32>} : memref<1x128xf32, #tpu.memory_space<vmem>>, vector<1x128xf32>,
    return
  }
}

</mosaic_0001>

<llo_original>
// kernel: pjoint_forward.1
$region0: #{pjoint_forward.1}
  #allocation0 [shape = 'u32[]', space=smem, size = 0x4, offset = 0x4, fixed_abs, tag = 'smem constant byte address 0x4 - core index']
  #allocation1 [shape = 'u32[144,128]{1,0:T(1,128)}', space=vmem, size = 0x12000, scoped, tag = 'internal scratch']
  %s0 = inlined_call_operand.vmem [shape: f32[3], index: 0, kind: input, shape index: {}]
  %s1 = inlined_call_operand.vmem [shape: f32[1,128], index: 1, kind: input, shape index: {}]
  %s2 = inlined_call_operand.vmem [shape: f32[1,128], index: 2, kind: output, shape index: {}]
  %s3 = sld [smem:[#allocation0]]
  $region22: #{pjoint_forward.1} parent=0
    _
  %s5 = ssub.s32 1, %s3
  %s6 = scalar_select 0, %s5, %s3
  $region1: #{pjoint_forward.1} parent=0
    #allocation2 [shape = 'u8[512]{0}', space=smem, size = 0x200, scoped, tag = 'input window, operand 0, single buffered']
    #allocation3 [shape = 's32[1]{0}', space=sflag, size = 0x4, scoped, tag = 'scoped memory for pjoint_forward.1']
    %7 = vsyncpa [#allocation3], 0
    // Predicated region
    $region2: #{pjoint_forward.1} parent=1 // pred_check
      _
    $region3: #{pjoint_forward.1} parent=1 // pred_check_branch
      %9 = sbr.rel (0) target = $region5
    $region4: #{pjoint_forward.1} parent=1 // pred_region
      %s11 = ssub.s32 16, 16
      %12 = vsyncadd [#allocation3], %s11
      %s14 = sshll.u32 %s0, 4
      %s15 = int_to_ptr.vmem [resolvable:$true] %s14
      %17 = dma.vmem_to_smem %s15, 16, [#allocation2], [#allocation3]
    $region5: #{pjoint_forward.1} parent=1 // pred_fallthru
      _
    // Predicated region
    $region6: #{pjoint_forward.1} parent=1 // pred_check
      _
    $region7: #{pjoint_forward.1} parent=1 // pred_check_branch
      %19 = sbr.rel (0) target = $region9
    $region8: #{pjoint_forward.1} parent=1 // pred_region
      _
    $region9: #{pjoint_forward.1} parent=1 // pred_fallthru
      _
    // Predicated region
    $region10: #{pjoint_forward.1} parent=1 // pred_check
      _
    $region11: #{pjoint_forward.1} parent=1 // pred_check_branch
      %21 = sbr.rel (0) target = $region13
    $region12: #{pjoint_forward.1} parent=1 // pred_region
      %22 = dma.done [#allocation3], 16
    $region13: #{pjoint_forward.1} parent=1 // pred_fallthru
      _
    %23 = sfence
    %v24 = vlaneseq
    %v25 = vand.u32 %v24, 127
    %v26 = vand.u32 %v25, 15
    %v27 = vshra.s32 %v26, 2
    %v28 = vand.u32 %v26, 3
    %vm29 = vcmp.eq.s32.totalorder %v27, %v28
    %v30 = vsel %vm29, 1.0, 0.0
    %s31 = sld [smem:[#allocation2]]
    %s32 = sld [smem:[#allocation2 + $0x1]]
    %s33 = sld [smem:[#allocation2 + $0x2]]
    %vm34 = vcmp.eq.s32.totalorder %v28, 3
    %vm35 = vcmp.eq.s32.totalorder %v27, 0
    %vm36 = vmand %vm34, %vm35
    %vm37 = vcmp.eq.s32.totalorder %v27, 1
    %vm38 = vmand %vm34, %vm37
    %vm39 = vcmp.eq.s32.totalorder %v27, 2
    %vm40 = vmand %vm34, %vm39
    %v41 = vstv %s33
    %v42 = vsel %vm40, %v41, 0.0
    %v43 = vstv %s32
    %v44 = vsel %vm38, %v43, %v42
    %v45 = vstv %s31
    %v46 = vsel %vm36, %v45, %v44
    %v47 = vld [vmem:[%s1] sm:$0x1]
    %v48 = vmul.f32 %v47, %v46
    %v49 = vadd.f32 %v30, %v48
    %50 = vst [vmem:[%s2] sm:$0x1] %v49
    // Predicated region
    $region14: #{pjoint_forward.1} parent=1 // pred_check
      _
    $region15: #{pjoint_forward.1} parent=1 // pred_check_branch
      %52 = sbr.rel (0) target = $region17
    $region16: #{pjoint_forward.1} parent=1 // pred_region
      _
    $region17: #{pjoint_forward.1} parent=1 // pred_fallthru
      _
    // Predicated region
    $region18: #{pjoint_forward.1} parent=1 // pred_check
      _
    $region19: #{pjoint_forward.1} parent=1 // pred_check_branch
      %54 = sbr.rel (0) target = $region21
    $region20: #{pjoint_forward.1} parent=1 // pred_region
      _
    $region21: #{pjoint_forward.1} parent=1 // pred_fallthru
      _
    %55 = vsyncpa [#allocation3], 1

</llo_original>
